<compile_context>
chip_gen: v7x
topology: tpu7x:2x2x1
jax: 0.10.0
libtpu: 0.0.40
codegen_flags: <defaults>
</compile_context>

<pallas_src>
import functools

import jax
import jax.numpy as jnp
from jax import lax
from jax.experimental import pallas as pl
from jax.experimental.pallas import tpu as pltpu


def _spp_kernel(x_ref, w1_ref, b1_ref, w2_ref, b2_ref, cm_ref, o_ref, pad_ref,
                *, H, W, matmul_dtype, pool_dtype):
    Cm = w1_ref.shape[0]
    HW = H * W
    PW = 2 * W                       # flattened halo: two rows' worth of lanes

    def mm(a, b):
        return jnp.dot(a.astype(matmul_dtype), b.astype(matmul_dtype),
                       preferred_element_type=jnp.float32)

    def lrelu(v):
        return jnp.where(v > 0, v, 0.1 * v)

    # ---- cv1: 1x1 conv (BN folded) + LeakyReLU(0.1); lanes carry H*W ----
    x = x_ref[0]                                         # [C1, HW]
    y = lrelu(mm(w1_ref[...], x) + b1_ref[...])          # [Cm, HW] f32
    yp = y.astype(pool_dtype)

    # ---- refresh only the 2W-lane -inf halos (everything written is read);
    #      done every grid step (not under pl.when) so it stays core-safe ----
    pad_ref[:, :PW] = jnp.full((Cm, PW), -jnp.inf, pool_dtype)
    pad_ref[:, PW + HW:] = jnp.full((Cm, PW), -jnp.inf, pool_dtype)

    # additive 0 / -inf column masks for the W-axis shifts {-2, -1, +1, +2}
    mL2 = cm_ref[0]                                      # [1, HW]
    mL1 = cm_ref[1]
    mR1 = cm_ref[2]
    mR2 = cm_ref[3]

    def pool5(a):
        """5x5, stride-1, '-inf same' max pool of a row-major [Cm, H*W] tile."""
        # H-axis 5 taps: lane shifts of +-W / +-2W; halo supplies the -inf rows.
        pad_ref[:, PW:PW + HW] = a
        r = jnp.maximum(
            jnp.maximum(pad_ref[:, 0:HW], pad_ref[:, W:W + HW]),
            jnp.maximum(pad_ref[:, 3 * W:3 * W + HW],
                        pad_ref[:, 4 * W:4 * W + HW]))
        r = jnp.maximum(r, a)
        # W-axis 5 taps: +-1/+-2 lane shifts; masks kill wrap across row ends.
        pad_ref[:, PW:PW + HW] = r
        c = jnp.maximum(
            jnp.maximum(pad_ref[:, PW - 2:PW - 2 + HW] + mL2,
                        pad_ref[:, PW - 1:PW - 1 + HW] + mL1),
            jnp.maximum(pad_ref[:, PW + 1:PW + 1 + HW] + mR1,
                        pad_ref[:, PW + 2:PW + 2 + HW] + mR2))
        return jnp.maximum(c, r)

    # SPPF cascade (exact for stride-1 '-inf same'-padded max pools)
    p5 = pool5(yp)
    p9 = pool5(p5)       # == 9x9  max pool of y
    p13 = pool5(p9)      # == 13x13 max pool of y

    # ---- cv2: split-w2 accumulation (no [4*Cm, HW] concat) + LeakyReLU ----
    z = mm(w2_ref[0], y)
    z = z + mm(w2_ref[1], p5)
    z = z + mm(w2_ref[2], p9)
    z = z + mm(w2_ref[3], p13)
    o_ref[0] = lrelu(z + b2_ref[...]).astype(o_ref.dtype)


def spp_pallas(x_nchw, w1t, b1, w2s, b2, *,
               matmul_dtype=jnp.bfloat16,   # MXU-native on v5e/v6e/v7x (f32 acc)
               pool_dtype=jnp.float32,      # bf16 recommended on v6e/v7x only
               io_dtype=jnp.bfloat16):      # HBM boundary dtype (halves DMA)
    """SPP forward.  x: [N, C1, H, W] (NCHW, same as PyTorch).

    w1t: [Cm, C1]    BN-folded cv1 weight,   b1: [Cm, 1]
    w2s: [4, C2, Cm] BN-folded cv2 weight split into the 4 concat chunks
                     (order: identity, pool5, pool9, pool13), b2: [C2, 1]
    """
    N, C1, H, W = x_nchw.shape
    Cm = w1t.shape[0]
    C2 = w2s.shape[1]
    HW = H * W

    x2 = x_nchw.reshape(N, C1, HW).astype(io_dtype)   # free reshape, no transpose
    w1c = w1t.astype(matmul_dtype)
    w2c = w2s.astype(matmul_dtype)
    b1c = b1.astype(jnp.float32)
    b2c = b2.astype(jnp.float32)

    # Additive 0 / -inf column masks for the W-axis lane shifts {-2,-1,+1,+2};
    # built once on the host side (trace time) and broadcast to every grid step.
    col = jnp.arange(HW, dtype=jnp.int32) % W
    ninf = jnp.float32(-jnp.inf)
    cmask = jnp.stack([
        jnp.where(col >= 2, 0.0, ninf),
        jnp.where(col >= 1, 0.0, ninf),
        jnp.where(col <= W - 2, 0.0, ninf),
        jnp.where(col <= W - 3, 0.0, ninf),
    ], axis=0).reshape(4, 1, HW).astype(pool_dtype)

    kernel = functools.partial(_spp_kernel, H=H, W=W,
                               matmul_dtype=matmul_dtype, pool_dtype=pool_dtype)
    out = pl.pallas_call(
        kernel,
        out_shape=jax.ShapeDtypeStruct((N, C2, HW), io_dtype),
        grid_spec=pltpu.PrefetchScalarGridSpec(
            num_scalar_prefetch=0,
            grid=(N,),
            in_specs=[
                pl.BlockSpec((1, C1, HW), lambda n: (n, 0, 0)),
                pl.BlockSpec((Cm, C1), lambda n: (0, 0)),
                pl.BlockSpec((Cm, 1), lambda n: (0, 0)),
                pl.BlockSpec((4, C2, Cm), lambda n: (0, 0, 0)),
                pl.BlockSpec((C2, 1), lambda n: (0, 0)),
                pl.BlockSpec((4, 1, HW), lambda n: (0, 0, 0)),
            ],
            out_specs=pl.BlockSpec((1, C2, HW), lambda n: (n, 0, 0)),
            scratch_shapes=[
                # flattened pooling scratch with a 2W -inf halo on each side
                pltpu.VMEM((Cm, HW + 4 * W), pool_dtype),
            ],
        ),
        compiler_params=pltpu.CompilerParams(
            dimension_semantics=("parallel",),
            # Explicit scoped-VMEM budget (tiny at test shapes; size to the
            # tiles once the H-tiled grid is added for realistic shapes).
            vmem_limit_bytes=32 * 1024 * 1024),
    )(x2, w1c, b1c, w2c, b2c, cmask)
    return out.reshape(N, C2, H, W)


def fold_bn(w, gamma, beta, mean, var, eps=1e-5):
    """Fold eval-mode BatchNorm into a 1x1 conv: w is [C_in, C_out]."""
    scale = gamma / jnp.sqrt(var + eps)
    return w * scale[None, :], beta - mean * scale


# ---------------- pure-JAX reference (unfolded conv + BN) ----------------
def ref_spp(x_nchw, w1, g1, be1, mu1, v1, w2, g2, be2, mu2, v2, eps=1e-5):
    def conv_bn_lrelu(a, w, g, be, mu, v):
        y = jnp.einsum('nhwc,cd->nhwd', a, w)
        y = (y - mu) / jnp.sqrt(v + eps) * g + be
        return jnp.where(y > 0, y, 0.1 * y)

    def mp(a, k):
        p = k // 2
        return lax.reduce_window(a, -jnp.inf, lax.max,
                                 (1, k, k, 1), (1, 1, 1, 1),
                                 [(0, 0), (p, p), (p, p), (0, 0)])

    x = jnp.transpose(x_nchw, (0, 2, 3, 1))
    y = conv_bn_lrelu(x, w1, g1, be1, mu1, v1)
    cat = jnp.concatenate([y, mp(y, 5), mp(y, 9), mp(y, 13)], axis=-1)
    z = conv_bn_lrelu(cat, w2, g2, be2, mu2, v2)
    return jnp.transpose(z, (0, 3, 1, 2))


if __name__ == "__main__":
    key = jax.random.PRNGKey(0)
    N, C1, H, W = 2, 8, 16, 16
    e = 0.5
    Cm = int(C1 * e)   # c_ = 4
    C2 = 8

    ks = jax.random.split(key, 16)
    x = jax.random.normal(ks[0], (N, C1, H, W), jnp.float32)

    # cv1: conv weight stored as [in, out]; BN running stats
    w1 = 0.3 * jax.random.normal(ks[1], (C1, Cm), jnp.float32)
    g1 = 1.0 + 0.1 * jax.random.normal(ks[2], (Cm,), jnp.float32)
    be1 = 0.1 * jax.random.normal(ks[3], (Cm,), jnp.float32)
    mu1 = 0.1 * jax.random.normal(ks[4], (Cm,), jnp.float32)
    v1 = jnp.abs(jax.random.normal(ks[5], (Cm,), jnp.float32)) + 0.5

    # cv2
    w2 = 0.3 * jax.random.normal(ks[6], (4 * Cm, C2), jnp.float32)
    g2 = 1.0 + 0.1 * jax.random.normal(ks[7], (C2,), jnp.float32)
    be2 = 0.1 * jax.random.normal(ks[8], (C2,), jnp.float32)
    mu2 = 0.1 * jax.random.normal(ks[9], (C2,), jnp.float32)
    v2 = jnp.abs(jax.random.normal(ks[10], (C2,), jnp.float32)) + 0.5

    # Fold BN into the conv weights/biases and re-orient for the kernel.
    w1f, b1f = fold_bn(w1, g1, be1, mu1, v1)          # [C1, Cm], [Cm]
    w2f, b2f = fold_bn(w2, g2, be2, mu2, v2)          # [4*Cm, C2], [C2]
    w1t = jnp.transpose(w1f)                          # [Cm, C1]
    b1c = b1f.reshape(Cm, 1)
    w2s = jnp.stack(                                  # [4, C2, Cm]
        [jnp.transpose(w2f[k * Cm:(k + 1) * Cm, :]) for k in range(4)], axis=0)
    b2c = b2f.reshape(C2, 1)

    ref = ref_spp(x, w1, g1, be1, mu1, v1, w2, g2, be2, mu2, v2)

    # 1) full-f32 configuration: tight check of the kernel logic.
    out32 = spp_pallas(x, w1t, b1c, w2s, b2c,
                       matmul_dtype=jnp.float32,
                       pool_dtype=jnp.float32,
                       io_dtype=jnp.float32)
    out32 = jax.block_until_ready(out32)
    assert out32.shape == (N, C2, H, W), out32.shape
    assert jnp.allclose(out32, ref, atol=1e-3, rtol=1e-3), (
        float(jnp.max(jnp.abs(out32 - ref))))

    # 2) recommended v6e/v7x production config: bf16 MXU inputs, bf16 HBM I/O
    #    and bf16 pooling path (f32 accumulation kept).  Looser, deliberate
    #    tolerance — the kernel logic is already verified by the f32 run.
    out_bf = spp_pallas(x, w1t, b1c, w2s, b2c,
                        matmul_dtype=jnp.bfloat16,
                        pool_dtype=jnp.bfloat16,
                        io_dtype=jnp.bfloat16)
    out_bf = jax.block_until_ready(out_bf).astype(jnp.float32)
    diff = jnp.abs(out_bf - ref)
    assert float(jnp.max(diff)) < 0.5 and float(jnp.mean(diff)) < 0.05, (
        float(jnp.max(diff)), float(jnp.mean(diff)))

    print("KERNEL_OK")
</pallas_src>

<mosaic_0001>
module attributes {stable_mosaic.version = 11 : i64} {
  func.func @_spp_kernel(%arg0: i32, %arg1: memref<1x8x256xf32, #tpu.memory_space<vmem>>, %arg2: memref<4x8xf32, #tpu.memory_space<vmem>>, %arg3: memref<4x1xf32, #tpu.memory_space<vmem>>, %arg4: memref<4x8x4xf32, #tpu.memory_space<vmem>>, %arg5: memref<8x1xf32, #tpu.memory_space<vmem>>, %arg6: memref<4x1x256xf32, #tpu.memory_space<vmem>>, %arg7: memref<1x8x256xf32, #tpu.memory_space<vmem>>, %arg8: memref<4x320xf32, #tpu.memory_space<vmem>>) attributes {dimension_semantics = [#tpu.dimension_semantics<parallel>], iteration_bounds = array<i64: 2>, scalar_prefetch = 0 : i64, scratch_operands = 1 : i64, tpu.core_type = #tpu.core_type<tc>, window_params = [{transform_indices = @transform_0, window_bounds = array<i64: 1, 8, 256>}, {pipeline_mode = #tpu.pipeline_mode<synchronous>, transform_indices = @transform_1, window_bounds = array<i64: 4, 8>}, {pipeline_mode = #tpu.pipeline_mode<synchronous>, transform_indices = @transform_2, window_bounds = array<i64: 4, 1>}, {pipeline_mode = #tpu.pipeline_mode<synchronous>, transform_indices = @transform_3, window_bounds = array<i64: 4, 8, 4>}, {pipeline_mode = #tpu.pipeline_mode<synchronous>, transform_indices = @transform_4, window_bounds = array<i64: 8, 1>}, {pipeline_mode = #tpu.pipeline_mode<synchronous>, transform_indices = @transform_5, window_bounds = array<i64: 4, 1, 256>}, {transform_indices = @transform_6, window_bounds = array<i64: 1, 8, 256>}]} {
    %c0 = arith.constant 0 : index
    %c0_0 = arith.constant 0 : index
    %c0_1 = arith.constant 0 : index
    %0 = vector.load %arg1[%c0, %c0_0, %c0_1] : memref<1x8x256xf32, #tpu.memory_space<vmem>>, vector<1x8x256xf32>
    %1 = vector.shape_cast %0 : vector<1x8x256xf32> to vector<8x256xf32>
    %c0_2 = arith.constant 0 : index
    %c0_3 = arith.constant 0 : index
    %2 = vector.load %arg2[%c0_2, %c0_3] : memref<4x8xf32, #tpu.memory_space<vmem>>, vector<4x8xf32>
    %cst = arith.constant dense<0.000000e+00> : vector<4x256xf32>
    %3 = tpu.matmul %2, %1, %cst {dimension_numbers = #tpu.dot_dimension_numbers<[1], [0], [0], [1], [0, 0, 1, 1], [], []>} : vector<4x8xf32>, vector<8x256xf32>, vector<4x256xf32> -> vector<4x256xf32>
    %c0_4 = arith.constant 0 : index
    %c0_5 = arith.constant 0 : index
    %4 = vector.load %arg3[%c0_4, %c0_5] : memref<4x1xf32, #tpu.memory_space<vmem>>, vector<4x1xf32>
    %5 = vector.broadcast %4 : vector<4x1xf32> to vector<4x256xf32>
    %6 = arith.addf %3, %5 : vector<4x256xf32>
    %cst_6 = arith.constant 0.000000e+00 : f32
    %7 = vector.broadcast %cst_6 : f32 to vector<4x256xf32>
    %8 = arith.cmpf ogt, %6, %7 : vector<4x256xf32>
    %cst_7 = arith.constant 1.000000e-01 : f32
    %9 = vector.broadcast %cst_7 : f32 to vector<4x256xf32>
    %10 = arith.mulf %9, %6 : vector<4x256xf32>
    %11 = arith.select %8, %6, %10 : vector<4x256xi1>, vector<4x256xf32>
    %cst_8 = arith.constant 0xFF800000 : f32
    %12 = vector.broadcast %cst_8 : f32 to vector<4x32xf32>
    %c0_9 = arith.constant 0 : index
    %c0_10 = arith.constant 0 : index
    %13 = vector.load %arg8[%c0_9, %c0_10] : memref<4x320xf32, #tpu.memory_space<vmem>>, vector<4x32xf32>
    tpu.vector_store %arg8[%c0_9, %c0_10], %12 {strides = array<i32>} : memref<4x320xf32, #tpu.memory_space<vmem>>, vector<4x32xf32>,
    %cst_11 = arith.constant 0xFF800000 : f32
    %14 = vector.broadcast %cst_11 : f32 to vector<4x32xf32>
    %c0_12 = arith.constant 0 : index
    %c288 = arith.constant 288 : index
    %15 = vector.load %arg8[%c0_12, %c288] : memref<4x320xf32, #tpu.memory_space<vmem>>, vector<4x32xf32>
    tpu.vector_store %arg8[%c0_12, %c288], %14 {strides = array<i32>} : memref<4x320xf32, #tpu.memory_space<vmem>>, vector<4x32xf32>,
    %c0_13 = arith.constant 0 : index
    %c0_14 = arith.constant 0 : index
    %c0_15 = arith.constant 0 : index
    %16 = vector.load %arg6[%c0_13, %c0_14, %c0_15] : memref<4x1x256xf32, #tpu.memory_space<vmem>>, vector<1x1x256xf32>
    %17 = vector.shape_cast %16 : vector<1x1x256xf32> to vector<1x256xf32>
    %c1 = arith.constant 1 : index
    %c0_16 = arith.constant 0 : index
    %c0_17 = arith.constant 0 : index
    %18 = vector.load %arg6[%c1, %c0_16, %c0_17] : memref<4x1x256xf32, #tpu.memory_space<vmem>>, vector<1x1x256xf32>
    %19 = vector.shape_cast %18 : vector<1x1x256xf32> to vector<1x256xf32>
    %c2 = arith.constant 2 : index
    %c0_18 = arith.constant 0 : index
    %c0_19 = arith.constant 0 : index
    %20 = vector.load %arg6[%c2, %c0_18, %c0_19] : memref<4x1x256xf32, #tpu.memory_space<vmem>>, vector<1x1x256xf32>
    %21 = vector.shape_cast %20 : vector<1x1x256xf32> to vector<1x256xf32>
    %c3 = arith.constant 3 : index
    %c0_20 = arith.constant 0 : index
    %c0_21 = arith.constant 0 : index
    %22 = vector.load %arg6[%c3, %c0_20, %c0_21] : memref<4x1x256xf32, #tpu.memory_space<vmem>>, vector<1x1x256xf32>
    %23 = vector.shape_cast %22 : vector<1x1x256xf32> to vector<1x256xf32>
    %c0_22 = arith.constant 0 : index
    %c32 = arith.constant 32 : index
    %24 = vector.load %arg8[%c0_22, %c32] : memref<4x320xf32, #tpu.memory_space<vmem>>, vector<4x256xf32>
    tpu.vector_store %arg8[%c0_22, %c32], %11 {strides = array<i32>} : memref<4x320xf32, #tpu.memory_space<vmem>>, vector<4x256xf32>,
    %c0_23 = arith.constant 0 : index
    %c0_24 = arith.constant 0 : index
    %25 = vector.load %arg8[%c0_23, %c0_24] : memref<4x320xf32, #tpu.memory_space<vmem>>, vector<4x256xf32>
    %c0_25 = arith.constant 0 : index
    %c16 = arith.constant 16 : index
    %26 = vector.load %arg8[%c0_25, %c16] : memref<4x320xf32, #tpu.memory_space<vmem>>, vector<4x256xf32>
    %27 = arith.maximumf %25, %26 : vector<4x256xf32>
    %c0_26 = arith.constant 0 : index
    %c48 = arith.constant 48 : index
    %28 = vector.load %arg8[%c0_26, %c48] : memref<4x320xf32, #tpu.memory_space<vmem>>, vector<4x256xf32>
    %c0_27 = arith.constant 0 : index
    %c64 = arith.constant 64 : index
    %29 = vector.load %arg8[%c0_27, %c64] : memref<4x320xf32, #tpu.memory_space<vmem>>, vector<4x256xf32>
    %30 = arith.maximumf %28, %29 : vector<4x256xf32>
    %31 = arith.maximumf %27, %30 : vector<4x256xf32>
    %32 = arith.maximumf %31, %11 : vector<4x256xf32>
    %c0_28 = arith.constant 0 : index
    %c32_29 = arith.constant 32 : index
    %33 = vector.load %arg8[%c0_28, %c32_29] : memref<4x320xf32, #tpu.memory_space<vmem>>, vector<4x256xf32>
    tpu.vector_store %arg8[%c0_28, %c32_29], %32 {strides = array<i32>} : memref<4x320xf32, #tpu.memory_space<vmem>>, vector<4x256xf32>,
    %c0_30 = arith.constant 0 : index
    %c30 = arith.constant 30 : index
    %34 = vector.load %arg8[%c0_30, %c30] : memref<4x320xf32, #tpu.memory_space<vmem>>, vector<4x256xf32>
    %35 = vector.broadcast %17 : vector<1x256xf32> to vector<4x256xf32>
    %36 = arith.addf %34, %35 : vector<4x256xf32>
    %c0_31 = arith.constant 0 : index
    %c31 = arith.constant 31 : index
    %37 = vector.load %arg8[%c0_31, %c31] : memref<4x320xf32, #tpu.memory_space<vmem>>, vector<4x256xf32>
    %38 = vector.broadcast %19 : vector<1x256xf32> to vector<4x256xf32>
    %39 = arith.addf %37, %38 : vector<4x256xf32>
    %40 = arith.maximumf %36, %39 : vector<4x256xf32>
    %c0_32 = arith.constant 0 : index
    %c33 = arith.constant 33 : index
    %41 = vector.load %arg8[%c0_32, %c33] : memref<4x320xf32, #tpu.memory_space<vmem>>, vector<4x256xf32>
    %42 = vector.broadcast %21 : vector<1x256xf32> to vector<4x256xf32>
    %43 = arith.addf %41, %42 : vector<4x256xf32>
    %c0_33 = arith.constant 0 : index
    %c34 = arith.constant 34 : index
    %44 = vector.load %arg8[%c0_33, %c34] : memref<4x320xf32, #tpu.memory_space<vmem>>, vector<4x256xf32>
    %45 = vector.broadcast %23 : vector<1x256xf32> to vector<4x256xf32>
    %46 = arith.addf %44, %45 : vector<4x256xf32>
    %47 = arith.maximumf %43, %46 : vector<4x256xf32>
    %48 = arith.maximumf %40, %47 : vector<4x256xf32>
    %49 = arith.maximumf %48, %32 : vector<4x256xf32>
    %c0_34 = arith.constant 0 : index
    %c32_35 = arith.constant 32 : index
    %50 = vector.load %arg8[%c0_34, %c32_35] : memref<4x320xf32, #tpu.memory_space<vmem>>, vector<4x256xf32>
    tpu.vector_store %arg8[%c0_34, %c32_35], %49 {strides = array<i32>} : memref<4x320xf32, #tpu.memory_space<vmem>>, vector<4x256xf32>,
    %c0_36 = arith.constant 0 : index
    %c0_37 = arith.constant 0 : index
    %51 = vector.load %arg8[%c0_36, %c0_37] : memref<4x320xf32, #tpu.memory_space<vmem>>, vector<4x256xf32>
    %c0_38 = arith.constant 0 : index
    %c16_39 = arith.constant 16 : index
    %52 = vector.load %arg8[%c0_38, %c16_39] : memref<4x320xf32, #tpu.memory_space<vmem>>, vector<4x256xf32>
    %53 = arith.maximumf %51, %52 : vector<4x256xf32>
    %c0_40 = arith.constant 0 : index
    %c48_41 = arith.constant 48 : index
    %54 = vector.load %arg8[%c0_40, %c48_41] : memref<4x320xf32, #tpu.memory_space<vmem>>, vector<4x256xf32>
    %c0_42 = arith.constant 0 : index
    %c64_43 = arith.constant 64 : index
    %55 = vector.load %arg8[%c0_42, %c64_43] : memref<4x320xf32, #tpu.memory_space<vmem>>, vector<4x256xf32>
    %56 = arith.maximumf %54, %55 : vector<4x256xf32>
    %57 = arith.maximumf %53, %56 : vector<4x256xf32>
    %58 = arith.maximumf %57, %49 : vector<4x256xf32>
    %c0_44 = arith.constant 0 : index
    %c32_45 = arith.constant 32 : index
    %59 = vector.load %arg8[%c0_44, %c32_45] : memref<4x320xf32, #tpu.memory_space<vmem>>, vector<4x256xf32>
    tpu.vector_store %arg8[%c0_44, %c32_45], %58 {strides = array<i32>} : memref<4x320xf32, #tpu.memory_space<vmem>>, vector<4x256xf32>,
    %c0_46 = arith.constant 0 : index
    %c30_47 = arith.constant 30 : index
    %60 = vector.load %arg8[%c0_46, %c30_47] : memref<4x320xf32, #tpu.memory_space<vmem>>, vector<4x256xf32>
    %61 = vector.broadcast %17 : vector<1x256xf32> to vector<4x256xf32>
    %62 = arith.addf %60, %61 : vector<4x256xf32>
    %c0_48 = arith.constant 0 : index
    %c31_49 = arith.constant 31 : index
    %63 = vector.load %arg8[%c0_48, %c31_49] : memref<4x320xf32, #tpu.memory_space<vmem>>, vector<4x256xf32>
    %64 = vector.broadcast %19 : vector<1x256xf32> to vector<4x256xf32>
    %65 = arith.addf %63, %64 : vector<4x256xf32>
    %66 = arith.maximumf %62, %65 : vector<4x256xf32>
    %c0_50 = arith.constant 0 : index
    %c33_51 = arith.constant 33 : index
    %67 = vector.load %arg8[%c0_50, %c33_51] : memref<4x320xf32, #tpu.memory_space<vmem>>, vector<4x256xf32>
    %68 = vector.broadcast %21 : vector<1x256xf32> to vector<4x256xf32>
    %69 = arith.addf %67, %68 : vector<4x256xf32>
    %c0_52 = arith.constant 0 : index
    %c34_53 = arith.constant 34 : index
    %70 = vector.load %arg8[%c0_52, %c34_53] : memref<4x320xf32, #tpu.memory_space<vmem>>, vector<4x256xf32>
    %71 = vector.broadcast %23 : vector<1x256xf32> to vector<4x256xf32>
    %72 = arith.addf %70, %71 : vector<4x256xf32>
    %73 = arith.maximumf %69, %72 : vector<4x256xf32>
    %74 = arith.maximumf %66, %73 : vector<4x256xf32>
    %75 = arith.maximumf %74, %58 : vector<4x256xf32>
    %c0_54 = arith.constant 0 : index
    %c32_55 = arith.constant 32 : index
    %76 = vector.load %arg8[%c0_54, %c32_55] : memref<4x320xf32, #tpu.memory_space<vmem>>, vector<4x256xf32>
    tpu.vector_store %arg8[%c0_54, %c32_55], %75 {strides = array<i32>} : memref<4x320xf32, #tpu.memory_space<vmem>>, vector<4x256xf32>,
    %c0_56 = arith.constant 0 : index
    %c0_57 = arith.constant 0 : index
    %77 = vector.load %arg8[%c0_56, %c0_57] : memref<4x320xf32, #tpu.memory_space<vmem>>, vector<4x256xf32>
    %c0_58 = arith.constant 0 : index
    %c16_59 = arith.constant 16 : index
    %78 = vector.load %arg8[%c0_58, %c16_59] : memref<4x320xf32, #tpu.memory_space<vmem>>, vector<4x256xf32>
    %79 = arith.maximumf %77, %78 : vector<4x256xf32>
    %c0_60 = arith.constant 0 : index
    %c48_61 = arith.constant 48 : index
    %80 = vector.load %arg8[%c0_60, %c48_61] : memref<4x320xf32, #tpu.memory_space<vmem>>, vector<4x256xf32>
    %c0_62 = arith.constant 0 : index
    %c64_63 = arith.constant 64 : index
    %81 = vector.load %arg8[%c0_62, %c64_63] : memref<4x320xf32, #tpu.memory_space<vmem>>, vector<4x256xf32>
    %82 = arith.maximumf %80, %81 : vector<4x256xf32>
    %83 = arith.maximumf %79, %82 : vector<4x256xf32>
    %84 = arith.maximumf %83, %75 : vector<4x256xf32>
    %c0_64 = arith.constant 0 : index
    %c32_65 = arith.constant 32 : index
    %85 = vector.load %arg8[%c0_64, %c32_65] : memref<4x320xf32, #tpu.memory_space<vmem>>, vector<4x256xf32>
    tpu.vector_store %arg8[%c0_64, %c32_65], %84 {strides = array<i32>} : memref<4x320xf32, #tpu.memory_space<vmem>>, vector<4x256xf32>,
    %c0_66 = arith.constant 0 : index
    %c30_67 = arith.constant 30 : index
    %86 = vector.load %arg8[%c0_66, %c30_67] : memref<4x320xf32, #tpu.memory_space<vmem>>, vector<4x256xf32>
    %87 = vector.broadcast %17 : vector<1x256xf32> to vector<4x256xf32>
    %88 = arith.addf %86, %87 : vector<4x256xf32>
    %c0_68 = arith.constant 0 : index
    %c31_69 = arith.constant 31 : index
    %89 = vector.load %arg8[%c0_68, %c31_69] : memref<4x320xf32, #tpu.memory_space<vmem>>, vector<4x256xf32>
    %90 = vector.broadcast %19 : vector<1x256xf32> to vector<4x256xf32>
    %91 = arith.addf %89, %90 : vector<4x256xf32>
    %92 = arith.maximumf %88, %91 : vector<4x256xf32>
    %c0_70 = arith.constant 0 : index
    %c33_71 = arith.constant 33 : index
    %93 = vector.load %arg8[%c0_70, %c33_71] : memref<4x320xf32, #tpu.memory_space<vmem>>, vector<4x256xf32>
    %94 = vector.broadcast %21 : vector<1x256xf32> to vector<4x256xf32>
    %95 = arith.addf %93, %94 : vector<4x256xf32>
    %c0_72 = arith.constant 0 : index
    %c34_73 = arith.constant 34 : index
    %96 = vector.load %arg8[%c0_72, %c34_73] : memref<4x320xf32, #tpu.memory_space<vmem>>, vector<4x256xf32>
    %97 = vector.broadcast %23 : vector<1x256xf32> to vector<4x256xf32>
    %98 = arith.addf %96, %97 : vector<4x256xf32>
    %99 = arith.maximumf %95, %98 : vector<4x256xf32>
    %100 = arith.maximumf %92, %99 : vector<4x256xf32>
    %101 = arith.maximumf %100, %84 : vector<4x256xf32>
    %c0_74 = arith.constant 0 : index
    %c0_75 = arith.constant 0 : index
    %c0_76 = arith.constant 0 : index
    %102 = vector.load %arg4[%c0_74, %c0_75, %c0_76] : memref<4x8x4xf32, #tpu.memory_space<vmem>>, vector<1x8x4xf32>
    %103 = vector.shape_cast %102 : vector<1x8x4xf32> to vector<8x4xf32>
    %cst_77 = arith.constant dense<0.000000e+00> : vector<8x256xf32>
    %104 = tpu.matmul %103, %11, %cst_77 {dimension_numbers = #tpu.dot_dimension_numbers<[1], [0], [0], [1], [0, 0, 1, 1], [], []>} : vector<8x4xf32>, vector<4x256xf32>, vector<8x256xf32> -> vector<8x256xf32>
    %c1_78 = arith.constant 1 : index
    %c0_79 = arith.constant 0 : index
    %c0_80 = arith.constant 0 : index
    %105 = vector.load %arg4[%c1_78, %c0_79, %c0_80] : memref<4x8x4xf32, #tpu.memory_space<vmem>>, vector<1x8x4xf32>
    %106 = vector.shape_cast %105 : vector<1x8x4xf32> to vector<8x4xf32>
    %cst_81 = arith.constant dense<0.000000e+00> : vector<8x256xf32>
    %107 = tpu.matmul %106, %49, %cst_81 {dimension_numbers = #tpu.dot_dimension_numbers<[1], [0], [0], [1], [0, 0, 1, 1], [], []>} : vector<8x4xf32>, vector<4x256xf32>, vector<8x256xf32> -> vector<8x256xf32>
    %108 = arith.addf %104, %107 : vector<8x256xf32>
    %c2_82 = arith.constant 2 : index
    %c0_83 = arith.constant 0 : index
    %c0_84 = arith.constant 0 : index
    %109 = vector.load %arg4[%c2_82, %c0_83, %c0_84] : memref<4x8x4xf32, #tpu.memory_space<vmem>>, vector<1x8x4xf32>
    %110 = vector.shape_cast %109 : vector<1x8x4xf32> to vector<8x4xf32>
    %cst_85 = arith.constant dense<0.000000e+00> : vector<8x256xf32>
    %111 = tpu.matmul %110, %75, %cst_85 {dimension_numbers = #tpu.dot_dimension_numbers<[1], [0], [0], [1], [0, 0, 1, 1], [], []>} : vector<8x4xf32>, vector<4x256xf32>, vector<8x256xf32> -> vector<8x256xf32>
    %112 = arith.addf %108, %111 : vector<8x256xf32>
    %c3_86 = arith.constant 3 : index
    %c0_87 = arith.constant 0 : index
    %c0_88 = arith.constant 0 : index
    %113 = vector.load %arg4[%c3_86, %c0_87, %c0_88] : memref<4x8x4xf32, #tpu.memory_space<vmem>>, vector<1x8x4xf32>
    %114 = vector.shape_cast %113 : vector<1x8x4xf32> to vector<8x4xf32>
    %cst_89 = arith.constant dense<0.000000e+00> : vector<8x256xf32>
    %115 = tpu.matmul %114, %101, %cst_89 {dimension_numbers = #tpu.dot_dimension_numbers<[1], [0], [0], [1], [0, 0, 1, 1], [], []>} : vector<8x4xf32>, vector<4x256xf32>, vector<8x256xf32> -> vector<8x256xf32>
    %116 = arith.addf %112, %115 : vector<8x256xf32>
    %c0_90 = arith.constant 0 : index
    %c0_91 = arith.constant 0 : index
    %117 = vector.load %arg5[%c0_90, %c0_91] : memref<8x1xf32, #tpu.memory_space<vmem>>, vector<8x1xf32>
    %118 = vector.broadcast %117 : vector<8x1xf32> to vector<8x256xf32>
    %119 = arith.addf %116, %118 : vector<8x256xf32>
    %cst_92 = arith.constant 0.000000e+00 : f32
    %120 = vector.broadcast %cst_92 : f32 to vector<8x256xf32>
    %121 = arith.cmpf ogt, %119, %120 : vector<8x256xf32>
    %cst_93 = arith.constant 1.000000e-01 : f32
    %122 = vector.broadcast %cst_93 : f32 to vector<8x256xf32>
    %123 = arith.mulf %122, %119 : vector<8x256xf32>
    %124 = arith.select %121, %119, %123 : vector<8x256xi1>, vector<8x256xf32>
    %c0_94 = arith.constant 0 : index
    %c0_95 = arith.constant 0 : index
    %c0_96 = arith.constant 0 : index
    %125 = vector.load %arg7[%c0_94, %c0_95, %c0_96] : memref<1x8x256xf32, #tpu.memory_space<vmem>>, vector<1x8x256xf32>
    %126 = vector.shape_cast %125 : vector<1x8x256xf32> to vector<8x256xf32>
    %127 = vector.shape_cast %124 : vector<8x256xf32> to vector<1x8x256xf32>
    tpu.vector_store %arg7[%c0_94, %c0_95, %c0_96], %127 {strides = array<i32>} : memref<1x8x256xf32, #tpu.memory_space<vmem>>, vector<1x8x256xf32>,
    return
  }
  func.func @transform_0(%arg0: i32) -> (i32, i32, i32) {
    %c0_i32 = arith.constant 0 : i32
    %c0_i32_0 = arith.constant 0 : i32
    %c0_i32_1 = arith.constant 0 : i32
    return %arg0, %c0_i32, %c0_i32_0 : i32, i32, i32
  }
  func.func @transform_1(%arg0: i32) -> (i32, i32) {
    %c0_i32 = arith.constant 0 : i32
    %c0_i32_0 = arith.constant 0 : i32
    %c0_i32_1 = arith.constant 0 : i32
    return %c0_i32, %c0_i32_0 : i32, i32
  }
  func.func @transform_2(%arg0: i32) -> (i32, i32) {
    %c0_i32 = arith.constant 0 : i32
    %c0_i32_0 = arith.constant 0 : i32
    %c0_i32_1 = arith.constant 0 : i32
    return %c0_i32, %c0_i32_0 : i32, i32
  }
  func.func @transform_3(%arg0: i32) -> (i32, i32, i32) {
    %c0_i32 = arith.constant 0 : i32
    %c0_i32_0 = arith.constant 0 : i32
    %c0_i32_1 = arith.constant 0 : i32
    %c0_i32_2 = arith.constant 0 : i32
    return %c0_i32, %c0_i32_0, %c0_i32_1 : i32, i32, i32
  }
  func.func @transform_4(%arg0: i32) -> (i32, i32) {
    %c0_i32 = arith.constant 0 : i32
    %c0_i32_0 = arith.constant 0 : i32
    %c0_i32_1 = arith.constant 0 : i32
    return %c0_i32, %c0_i32_0 : i32, i32
  }
  func.func @transform_5(%arg0: i32) -> (i32, i32, i32) {
    %c0_i32 = arith.constant 0 : i32
    %c0_i32_0 = arith.constant 0 : i32
    %c0_i32_1 = arith.constant 0 : i32
    %c0_i32_2 = arith.constant 0 : i32
    return %c0_i32, %c0_i32_0, %c0_i32_1 : i32, i32, i32
  }
  func.func @transform_6(%arg0: i32) -> (i32, i32, i32) {
    %c0_i32 = arith.constant 0 : i32
    %c0_i32_0 = arith.constant 0 : i32
    %c0_i32_1 = arith.constant 0 : i32
    return %arg0, %c0_i32, %c0_i32_0 : i32, i32, i32
  }
}

</mosaic_0001>

<llo_original>
// kernel: tpu_custom_call.1
$region0: #{tpu_custom_call.1}
  #allocation0 [shape = 'u32[]', space=smem, size = 0x4, offset = 0x4, fixed_abs, tag = 'smem constant byte address 0x4 - core index']
  #allocation1 [shape = 'u32[144,128]{1,0:T(1,128)}', space=vmem, size = 0x12000, scoped, tag = 'internal scratch']
  #allocation2 [shape = 'f32[4,320]{1,0:T(4,128)}', space=vmem, size = 0x1800, scoped, tag = 'scratch operand']
  %s0 = inlined_call_operand.vmem [shape: f32[2,8,256], index: 0, kind: input, shape index: {}]
  %s1 = inlined_call_operand.vmem [shape: f32[4,8], index: 1, kind: input, shape index: {}]
  %s2 = inlined_call_operand.vmem [shape: f32[4,1], index: 2, kind: input, shape index: {}]
  %s3 = inlined_call_operand.vmem [shape: f32[4,8,4], index: 3, kind: input, shape index: {}]
  %s4 = inlined_call_operand.vmem [shape: f32[8,1], index: 4, kind: input, shape index: {}]
  %s5 = inlined_call_operand.vmem [shape: f32[4,1,256], index: 5, kind: input, shape index: {}]
  %s6 = inlined_call_operand.hbm [shape: f32[2,8,256], index: 6, kind: output, shape index: {}]
  %s7 = sld [smem:[#allocation0]]
  $region57: #{tpu_custom_call.1} parent=0
    _
  %s9 = ssub.s32 1, %s7
  %s10 = scalar_select 0, %s9, %s7
  $region1: #{tpu_custom_call.1} parent=0
    #allocation3 [shape = 'u8[16384]{0}', space=vmem, size = 0x4000, scoped, tag = 'output window, operand 0']
    #allocation4 [shape = 's32[2]{0}', space=sflag, size = 0x8, scoped, tag = 'scoped memory for tpu_custom_call.1']
    %11 = vsyncpa [#allocation4], 0
    %s12 = scalar_lea.sflag [#allocation4], 1
    %13 = vsyncpa %s12, 0
    loop: start=0, step=1, limit=4
    $region2: #{tpu_custom_call.1} parent=1 // loop_pre_header
      _
    $region3: #{tpu_custom_call.1} parent=1 // loop_header
      %s15 = sphi 0, %s19
      %p16 = scmp.ge.s32.totalorder %s15, 4
      %s25 = sphi 0, %s27
      %s28 = sphi 0, %s25
      %s29 = sphi 0, %s28
      %s45 = sphi 0, %s29
      %s49 = sphi 0, %s49
      %s51 = sphi 0, %s49
      %s52 = sphi 0, %s51
      %s66 = sphi 0, %s52
      %s70 = sphi 0, %s70
      %s72 = sphi 0, %s70
      %s73 = sphi 0, %s72
      %s87 = sphi 0, %s73
      %s91 = sphi 0, %s91
      %s93 = sphi 0, %s91
      %s94 = sphi 0, %s93
      %s108 = sphi 0, %s94
      %s112 = sphi 0, %s112
      %s114 = sphi 0, %s112
      %s115 = sphi 0, %s114
      %s129 = sphi 0, %s115
      %s133 = sphi 0, %s133
      %s135 = sphi 0, %s133
      %s136 = sphi 0, %s135
      %s150 = sphi 0, %s136
      %s156 = sphi 0, %s158
      %s159 = sphi 0, %s156
      %s160 = sphi 0, %s159
      %s176 = sphi 0, %s160
    $region4: #{tpu_custom_call.1} parent=1 // loop_header_branch
      %18 = sbr.rel (%p16) target = $region8
    $region5: #{tpu_custom_call.1} parent=1 // loop_body
      %s20 = ssub.s32 %s15, 1
      %s21 = ssub.s32 %s15, 2
      %s22 = sadd.s32 %s15, 1
      %s23 = ssub.s32 %s15, %s22
      %p24 = scmp.eq.s32.totalorder %s23, 0
      %s26 = sadd.s32 %s25, 1
      %s27 = scalar_select %p24, %s25, %s26
      %p30 = pneg %p24
      %p31 = scmp.eq.s32.totalorder %s15, 1
      %p32 = por %p30, %p31
      %p33 = scmp.ne.s32.totalorder %s25, %s28
      %p34 = scmp.eq.s32.totalorder %s15, 0
      %p35 = por %p33, %p34
      %p36 = scmp.ne.s32.totalorder %s25, %s28
      %p37 = scmp.eq.s32.totalorder %s20, 1
      %p38 = por %p36, %p37
      %p39 = scmp.ne.s32.totalorder %s28, %s29
      %p40 = scmp.eq.s32.totalorder %s20, 0
      %p41 = por %p39, %p40
      %p42 = scmp.ne.s32.totalorder %s28, %s29
      %p43 = scmp.eq.s32.totalorder %s21, 1
      %p44 = por %p42, %p43
      %p46 = scmp.ne.s32.totalorder %s29, %s45
      %p47 = scmp.eq.s32.totalorder %s21, 0
      %p48 = por %p46, %p47
      %s50 = sadd.s32 %s49, 1
      %p53 = scmp.eq.s32.totalorder %s15, 1
      %p54 = scmp.ne.s32.totalorder %s49, %s51
      %p55 = scmp.eq.s32.totalorder %s15, 0
      %p56 = por %p54, %p55
      %p57 = scmp.ne.s32.totalorder %s49, %s51
      %p58 = scmp.eq.s32.totalorder %s20, 1
      %p59 = por %p57, %p58
      %p60 = scmp.ne.s32.totalorder %s51, %s52
      %p61 = scmp.eq.s32.totalorder %s20, 0
      %p62 = por %p60, %p61
      %p63 = scmp.ne.s32.totalorder %s51, %s52
      %p64 = scmp.eq.s32.totalorder %s21, 1
      %p65 = por %p63, %p64
      %p67 = scmp.ne.s32.totalorder %s52, %s66
      %p68 = scmp.eq.s32.totalorder %s21, 0
      %p69 = por %p67, %p68
      %s71 = sadd.s32 %s70, 1
      %p74 = scmp.eq.s32.totalorder %s15, 1
      %p75 = scmp.ne.s32.totalorder %s70, %s72
      %p76 = scmp.eq.s32.totalorder %s15, 0
      %p77 = por %p75, %p76
      %p78 = scmp.ne.s32.totalorder %s70, %s72
      %p79 = scmp.eq.s32.totalorder %s20, 1
      %p80 = por %p78, %p79
      %p81 = scmp.ne.s32.totalorder %s72, %s73
      %p82 = scmp.eq.s32.totalorder %s20, 0
      %p83 = por %p81, %p82
      %p84 = scmp.ne.s32.totalorder %s72, %s73
      %p85 = scmp.eq.s32.totalorder %s21, 1
      %p86 = por %p84, %p85
      %p88 = scmp.ne.s32.totalorder %s73, %s87
      %p89 = scmp.eq.s32.totalorder %s21, 0
      %p90 = por %p88, %p89
      %s92 = sadd.s32 %s91, 1
      %p95 = scmp.eq.s32.totalorder %s15, 1
      %p96 = scmp.ne.s32.totalorder %s91, %s93
      %p97 = scmp.eq.s32.totalorder %s15, 0
      %p98 = por %p96, %p97
      %p99 = scmp.ne.s32.totalorder %s91, %s93
      %p100 = scmp.eq.s32.totalorder %s20, 1
      %p101 = por %p99, %p100
      %p102 = scmp.ne.s32.totalorder %s93, %s94
      %p103 = scmp.eq.s32.totalorder %s20, 0
      %p104 = por %p102, %p103
      %p105 = scmp.ne.s32.totalorder %s93, %s94
      %p106 = scmp.eq.s32.totalorder %s21, 1
      %p107 = por %p105, %p106
      %p109 = scmp.ne.s32.totalorder %s94, %s108
      %p110 = scmp.eq.s32.totalorder %s21, 0
      %p111 = por %p109, %p110
      %s113 = sadd.s32 %s112, 1
      %p116 = scmp.eq.s32.totalorder %s15, 1
      %p117 = scmp.ne.s32.totalorder %s112, %s114
      %p118 = scmp.eq.s32.totalorder %s15, 0
      %p119 = por %p117, %p118
      %p120 = scmp.ne.s32.totalorder %s112, %s114
      %p121 = scmp.eq.s32.totalorder %s20, 1
      %p122 = por %p120, %p121
      %p123 = scmp.ne.s32.totalorder %s114, %s115
      %p124 = scmp.eq.s32.totalorder %s20, 0
      %p125 = por %p123, %p124
      %p126 = scmp.ne.s32.totalorder %s114, %s115
      %p127 = scmp.eq.s32.totalorder %s21, 1
      %p128 = por %p126, %p127
      %p130 = scmp.ne.s32.totalorder %s115, %s129
      %p131 = scmp.eq.s32.totalorder %s21, 0
      %p132 = por %p130, %p131
      %s134 = sadd.s32 %s133, 1
      %p137 = scmp.eq.s32.totalorder %s15, 1
      %p138 = scmp.ne.s32.totalorder %s133, %s135
      %p139 = scmp.eq.s32.totalorder %s15, 0
      %p140 = por %p138, %p139
      %p141 = scmp.ne.s32.totalorder %s133, %s135
      %p142 = scmp.eq.s32.totalorder %s20, 1
      %p143 = por %p141, %p142
      %p144 = scmp.ne.s32.totalorder %s135, %s136
      %p145 = scmp.eq.s32.totalorder %s20, 0
      %p146 = por %p144, %p145
      %p147 = scmp.ne.s32.totalorder %s135, %s136
      %p148 = scmp.eq.s32.totalorder %s21, 1
      %p149 = por %p147, %p148
      %p151 = scmp.ne.s32.totalorder %s136, %s150
      %p152 = scmp.eq.s32.totalorder %s21, 0
      %p153 = por %p151, %p152
      %s154 = ssub.s32 %s15, %s22
      %p155 = scmp.eq.s32.totalorder %s154, 0
      %s157 = sadd.s32 %s156, 1
      %s158 = scalar_select %p155, %s156, %s157
      %p161 = pneg %p155
      %p162 = scmp.eq.s32.totalorder %s15, 1
      %p163 = por %p161, %p162
      %p164 = scmp.ne.s32.totalorder %s156, %s159
      %p165 = scmp.eq.s32.totalorder %s15, 0
      %p166 = por %p164, %p165
      %p167 = scmp.ne.s32.totalorder %s156, %s159
      %p168 = scmp.eq.s32.totalorder %s20, 1
      %p169 = por %p167, %p168
      %p170 = scmp.ne.s32.totalorder %s159, %s160
      %p171 = scmp.eq.s32.totalorder %s20, 0
      %p172 = por %p170, %p171
      %p173 = scmp.ne.s32.totalorder %s159, %s160
      %p174 = scmp.eq.s32.totalorder %s21, 1
      %p175 = por %p173, %p174
      %p177 = scmp.ne.s32.totalorder %s160, %s176
      %p178 = scmp.eq.s32.totalorder %s21, 0
      %p179 = por %p177, %p178
      %p180 = scmp.le.s32.totalorder 1, %s15
      %p181 = scmp.lt.s32.totalorder %s15, 3
      %p182 = pnand %p180, %p181
      %p183 = pneg %p182
      // Predicated region
      $region9: #{tpu_custom_call.1} parent=5 // pred_check
        _
      $region10: #{tpu_custom_call.1} parent=5 // pred_check_branch
        %185 = sbr.rel (%p182) target = $region12
      $region11: #{tpu_custom_call.1} parent=5 // pred_region
        %s186 = ssub.s32 %s15, 1
        // Predicated region
        $region13: #{tpu_custom_call.1} parent=11 // pred_check
          %p187 = pneg %p62
        $region14: #{tpu_custom_call.1} parent=11 // pred_check_branch
          %189 = sbr.rel (%p187) target = $region16
        $region15: #{tpu_custom_call.1} parent=11 // pred_region
          _
        $region16: #{tpu_custom_call.1} parent=11 // pred_fallthru
          _
        // Predicated region
        $region17: #{tpu_custom_call.1} parent=11 // pred_check
          %p190 = pneg %p83
        $region18: #{tpu_custom_call.1} parent=11 // pred_check_branch
          %192 = sbr.rel (%p190) target = $region20
        $region19: #{tpu_custom_call.1} parent=11 // pred_region
          _
        $region20: #{tpu_custom_call.1} parent=11 // pred_fallthru
          _
        // Predicated region
        $region21: #{tpu_custom_call.1} parent=11 // pred_check
          %p193 = pneg %p104
        $region22: #{tpu_custom_call.1} parent=11 // pred_check_branch
          %195 = sbr.rel (%p193) target = $region24
        $region23: #{tpu_custom_call.1} parent=11 // pred_region
          _
        $region24: #{tpu_custom_call.1} parent=11 // pred_fallthru
          _
        // Predicated region
        $region25: #{tpu_custom_call.1} parent=11 // pred_check
          %p196 = pneg %p125
        $region26: #{tpu_custom_call.1} parent=11 // pred_check_branch
          %198 = sbr.rel (%p196) target = $region28
        $region27: #{tpu_custom_call.1} parent=11 // pred_region
          _
        $region28: #{tpu_custom_call.1} parent=11 // pred_fallthru
          _
        // Predicated region
        $region29: #{tpu_custom_call.1} parent=11 // pred_check
          %p199 = pneg %p146
        $region30: #{tpu_custom_call.1} parent=11 // pred_check_branch
          %201 = sbr.rel (%p199) target = $region32
        $region31: #{tpu_custom_call.1} parent=11 // pred_region
          _
        $region32: #{tpu_custom_call.1} parent=11 // pred_fallthru
          _
      $region12: #{tpu_custom_call.1} parent=5 // pred_fallthru
        _
      %p202 = scmp.lt.s32.totalorder %s15, 2
      // Predicated region
      $region33: #{tpu_custom_call.1} parent=5 // pred_check
        %p203 = pneg %p202
      $region34: #{tpu_custom_call.1} parent=5 // pred_check_branch
        %205 = sbr.rel (%p203) target = $region36
      $region35: #{tpu_custom_call.1} parent=5 // pred_region
        // Predicated region
        $region37: #{tpu_custom_call.1} parent=35 // pred_check
          %p206 = pneg %p35
        $region38: #{tpu_custom_call.1} parent=35 // pred_check_branch
          %208 = sbr.rel (%p206) target = $region40
        $region39: #{tpu_custom_call.1} parent=35 // pred_region
          %p209 = scmp.lt.s32.totalorder %s15, 1
          %s210 = scalar_select %p209, %s15, 1
          %s211 = smul.addr %s210, 2
          %s212 = smul.addr %s211, 8
          %s213 = scalar_lea.vmem %s0, %s212
        $region40: #{tpu_custom_call.1} parent=35 // pred_fallthru
          _
      $region36: #{tpu_custom_call.1} parent=5 // pred_fallthru
        _
      %p214 = scmp.le.s32.totalorder 1, %s15
      %p215 = scmp.lt.s32.totalorder %s15, 3
      %p216 = pnand %p214, %p215
      %p217 = pneg %p216
      // Predicated region
      $region41: #{tpu_custom_call.1} parent=5 // pred_check
        _
      $region42: #{tpu_custom_call.1} parent=5 // pred_check_branch
        %219 = sbr.rel (%p216) target = $region44
      $region43: #{tpu_custom_call.1} parent=5 // pred_region
        %s220 = ssub.s32 %s15, 1
        %p221 = scmp.lt.s32.totalorder %s20, 1
        %s222 = scalar_select %p221, %s20, 1
        %s223 = smul.addr %s222, 2
        %s224 = smul.addr %s223, 8
        %s225 = scalar_lea.vmem %s0, %s224
        %p226 = pneg %p41
        %p227 = pneg %p38
        %p228 = pneg %p62
        %p229 = pneg %p59
        %p230 = pneg %p83
        %p231 = pneg %p80
        %p232 = pneg %p104
        %p233 = pneg %p101
        %p234 = pneg %p125
        %p235 = pneg %p122
        %p236 = pneg %p146
        %p237 = pneg %p143
        %p238 = pneg %p172
        %p239 = pneg %p169
        %s240 = sand.u32 %s159, 1
        %s241 = scalar_lea.sflag [#allocation4], %s240
        %s242 = sand.u32 %s159, 1
        %s243 = smul.addr %s242, 16
        %s244 = scalar_lea.vmem [#allocation3], %s243
        %p245 = scmp.lt.s32.totalorder %s20, 1
        %s246 = scalar_select %p245, %s20, 1
        %s247 = smul.addr %s246, 2
        %s248 = smul.addr %s247, 8
        %s249 = scalar_lea.vmem %s0, %s248
        %v250 = vld [vmem:[%s249] sm:$0xff]
        %v251 = vld [vmem:[%s249 + $0x8] sm:$0xff]
        %v252 = vld [vmem:[%s1] sm:$0xf]
        %v253 = vld [vmem:[%s2] sm:$0xf]
        %255 = vset.pattern.permute.xlu0 0
        %256 = vperm.xlu0 %255, %v253
        %v257 = vpop.permute.xlu0 %256
        %vm259 = vcmask 64512
        %v261 = vsel %vm259, %v252, 0
        %263 = vmatprep.subr.mxu0 %v251
        %264 = vmatpush1.msra.mxu0 %v250
        %265 = vmatprep.subr.mxu0 0.0
        %266 = vmatpush1.msra.mxu0 0.0
        %267 = vmatprep.subr.mxu0 0.0
        %268 = vmatpush1.msra.mxu0 0.0
        %269 = vmatprep.subr.mxu0 0.0
        %270 = vmatpush1.msra.mxu0 0.0
        %271 = vmatprep.subr.mxu0 0.0
        %272 = vmatpush1.msra.mxu0 0.0
        %273 = vmatprep.subr.mxu0 0.0
        %274 = vmatpush1.msra.mxu0 0.0
        %275 = vmatprep.subr.mxu0 0.0
        %276 = vmatpush1.msra.mxu0 0.0
        %277 = vmatprep.subr.mxu0 0.0
        %278 = vmatpush1.msra.mxu0 0.0
        %279 = vmatprep.subr.mxu0 0.0
        %280 = vmatpush1.msra.mxu0 0.0
        %281 = vmatprep.subr.mxu0 0.0
        %282 = vmatpush1.msra.mxu0 0.0
        %283 = vmatprep.subr.mxu0 0.0
        %284 = vmatpush1.msra.mxu0 0.0
        %285 = vmatprep.subr.mxu0 0.0
        %286 = vmatpush1.msra.mxu0 0.0
        %287 = vmatprep.subr.mxu0 0.0
        %288 = vmatpush1.msra.mxu0 0.0
        %289 = vmatprep.subr.mxu0 0.0
        %290 = vmatpush1.msra.mxu0 0.0
        %291 = vmatprep.subr.mxu0 0.0
        %292 = vmatpush1.msra.mxu0 0.0
        %293 = vmatprep.subr.mxu0 0.0
        %294 = vmatpush1.msra.mxu0 0.0
        %295 = vmatprep.subr.mxu0 0.0
        %296 = vmatpush1.msra.mxu0 0.0
        %297 = vmatprep.subr.mxu0 0.0
        %298 = vmatpush1.msra.mxu0 0.0
        %299 = vmatprep.subr.mxu0 0.0
        %300 = vmatpush1.msra.mxu0 0.0
        %301 = vmatprep.subr.mxu0 0.0
        %302 = vmatpush1.msra.mxu0 0.0
        %303 = vmatprep.subr.mxu0 0.0
        %304 = vmatpush1.msra.mxu0 0.0
        %305 = vmatprep.subr.mxu0 0.0
        %306 = vmatpush1.msra.mxu0 0.0
        %307 = vmatprep.subr.mxu0 0.0
        %308 = vmatpush1.msra.mxu0 0.0
        %309 = vmatprep.subr.mxu0 0.0
        %310 = vmatpush1.msra.mxu0 0.0
        %311 = vmatprep.subr.mxu0 0.0
        %312 = vmatpush1.msra.mxu0 0.0
        %313 = vmatprep.subr.mxu0 0.0
        %314 = vmatpush1.msra.mxu0 0.0
        %315 = vmatprep.subr.mxu0 0.0
        %316 = vmatpush1.msra.mxu0 0.0
        %317 = vmatprep.subr.mxu0 0.0
        %318 = vmatpush1.msra.mxu0 0.0
        %319 = vmatprep.subr.mxu0 0.0
        %320 = vmatpush1.msra.mxu0 0.0
        %321 = vmatprep.subr.mxu0 0.0
        %322 = vmatpush1.msra.mxu0 0.0
        %323 = vmatprep.subr.mxu0 0.0
        %324 = vmatpush1.msra.mxu0 0.0
        %325 = vmatprep.subr.mxu0 0.0
        %326 = vmatpush1.msra.mxu0 0.0
        %327 = vmatprep.mubr.f32.mxu0 0.0
        %328 = vmatmul.mubr.f32.gmra.mrb[0].mxu0 %v261
        %v329 = vpop.f32.mrb[0].mxu0
        %v330 = vadd.f32 %v257, %v329
        %v331 = vpop.f32.mrb[0].mxu0
        %v332 = vadd.f32 %v257, %v331
        %333 = vdwg.mxu0
        %vm334 = vcmp.gt.f32.partialorder %v330, 0.0
        %vm335 = vcmp.gt.f32.partialorder %v332, 0.0
        %v336 = vmul.f32 %v330, 0.1
        %v337 = vmul.f32 %v332, 0.1
        %v338 = vsel %vm334, %v330, %v336
        %v339 = vsel %vm335, %v332, %v337
        %vm340 = vcmask 257024
        %341 = vst.msk [vmem:[#allocation2] sm:$0xf] %vm340, -inf
        %vm342 = vcmask 519424
        %343 = vst.msk [vmem:[#allocation2 + $0x8] sm:$0xf] %vm342, -inf
        %v344 = vld [vmem:[%s5] sm:$0x3]
        %s345 = scalar_lea.vmem %s5, 2
        %v346 = vld [vmem:[%s345] sm:$0x3]
        %s347 = scalar_lea.vmem %s5, 4
        %v348 = vld [vmem:[%s347] sm:$0x3]
        %s349 = scalar_lea.vmem %s5, 6
        %v350 = vld [vmem:[%s349] sm:$0x3]
        %v353 = vcombine.low %v338, %v339
        %354 = vrot.lane.b32.xlu0 %v353, 32
        %v355 = vpop.permute.xlu0 %354
        %v356 = vrot.slane %v355, 4
        %vm357 = vcmask 261120
        %v358 = vsel %vm357, %v356, %v355
        %vm361 = vcmask 1043712
        %vm362 = vcmask 1047556
        %vm363 = vmor %vm362, %vm361
        %364 = vst.msk [vmem:[#allocation2] sm:$0xff] %vm363, %v358
        %365 = vst.msk [vmem:[#allocation2 + $0x8] sm:$0xf] %vm340, %v356
        %v366 = vld [vmem:[#allocation2] sm:$0xff]
        %v367 = vld [vmem:[#allocation2 + $0x8] sm:$0xf]
        %370 = vrot.lane.b32.xlu0 %v366, 112
        %v371 = vpop.permute.xlu0 %370
        %372 = vrot.lane.b32.xlu0 %v367, 112
        %v373 = vpop.permute.xlu0 %372
        %v374 = vrot.slane %v371, 4
        %v375 = vrot.slane %v373, 4
        %vm376 = vcmask 1043456
        %v377 = vsel %vm376, %v374, %v375
        %vm378 = vcmask 916480
        %v379 = vsel %vm378, %v371, %v377
        %v381 = vmax.f32 %v366, %v379
        %v383 = vmax.f32 %v367, %v373
        %386 = vrot.lane.b32.xlu0 %v381, 80
        %v387 = vpop.permute.xlu0 %386
        %388 = vrot.lane.b32.xlu0 %v383, 80
        %v389 = vpop.permute.xlu0 %388
        %v390 = vrot.slane %v387, 4
        %v391 = vrot.slane %v389, 4
        %v392 = vsel %vm376, %v390, %v391
        %vm393 = vcmask 654336
        %v394 = vsel %vm393, %v387, %v392
        %v396 = vmax.f32 %v381, %v394
        %v398 = vmax.f32 %v396, %v353
        %400 = vrot.lane.b32.xlu0 %v398, 32
        %v401 = vpop.permute.xlu0 %400
        %v402 = vrot.slane %v401, 4
        %v403 = vsel %vm357, %v402, %v401
        %406 = vst.msk [vmem:[#allocation2] sm:$0xff] %vm363, %v403
        %407 = vst.msk [vmem:[#allocation2 + $0x8] sm:$0xf] %vm340, %v402
        %v408 = vld [vmem:[#allocation2] sm:$0xff]
        %v409 = vld [vmem:[#allocation2 + $0x8] sm:$0xf]
        %v411 = vlaneseq
        %v412 = vshrl.u32 %v411, 7
        %v413 = vsub.s32 0, %v412
        %v414 = vrot.slane %v344, %v413
        %v415 = vlaneseq
        %v416 = vshrl.u32 %v415, 7
        %v417 = vsub.s32 1, %v416
        %v418 = vrot.slane %v344, %v417
        %v419 = vcombine.low %v414, %v418
        %420 = vrot.lane.b32.xlu0 %v419, 30
        %v421 = vpop.permute.xlu0 %420
        %v422 = vrot.slane %v421, 4
        %vm423 = vcmask 244736
        %v424 = vsel %vm423, %v422, %v421
        %v427 = vadd.f32 %v408, %v424
        %v428 = vadd.f32 %v409, %v422
        %v430 = vlaneseq
        %v431 = vshrl.u32 %v430, 7
        %v432 = vsub.s32 0, %v431
        %v433 = vrot.slane %v346, %v432
        %v434 = vlaneseq
        %v435 = vshrl.u32 %v434, 7
        %v436 = vsub.s32 1, %v435
        %v437 = vrot.slane %v346, %v436
        %v438 = vcombine.low %v433, %v437
        %439 = vrot.lane.b32.xlu0 %v438, 31
        %v440 = vpop.permute.xlu0 %439
        %v441 = vrot.slane %v440, 4
        %vm442 = vcmask 252928
        %v443 = vsel %vm442, %v441, %v440
        %v446 = vadd.f32 %v408, %v443
        %v447 = vadd.f32 %v409, %v441
        %450 = vrot.lane.b32.xlu0 %v446, 127
        %v451 = vpop.permute.xlu0 %450
        %452 = vrot.lane.b32.xlu0 %v447, 127
        %v453 = vpop.permute.xlu0 %452
        %v454 = vrot.slane %v451, 4
        %v455 = vrot.slane %v453, 4
        %v456 = vsel %vm376, %v454, %v455
        %vm457 = vcmask 1039360
        %v458 = vsel %vm457, %v451, %v456
        %v461 = vmax.f32 %v427, %v458
        %v462 = vmax.f32 %v428, %v453
        %v464 = vlaneseq
        %v465 = vshrl.u32 %v464, 7
        %v466 = vsub.s32 0, %v465
        %v467 = vrot.slane %v348, %v466
        %v468 = vlaneseq
        %v469 = vshrl.u32 %v468, 7
        %v470 = vsub.s32 1, %v469
        %v471 = vrot.slane %v348, %v470
        %v472 = vcombine.low %v467, %v471
        %473 = vrot.lane.b32.xlu0 %v472, 33
        %v474 = vpop.permute.xlu0 %473
        %v475 = vrot.slane %v474, 4
        %vm476 = vcmask 269312
        %v477 = vsel %vm476, %v475, %v474
        %v480 = vadd.f32 %v408, %v477
        %v481 = vadd.f32 %v409, %v475
        %v483 = vlaneseq
        %v484 = vshrl.u32 %v483, 7
        %v485 = vsub.s32 0, %v484
        %v486 = vrot.slane %v350, %v485
        %v487 = vlaneseq
        %v488 = vshrl.u32 %v487, 7
        %v489 = vsub.s32 1, %v488
        %v490 = vrot.slane %v350, %v489
        %v491 = vcombine.low %v486, %v490
        %492 = vrot.lane.b32.xlu0 %v491, 34
        %v493 = vpop.permute.xlu0 %492
        %v494 = vrot.slane %v493, 4
        %vm495 = vcmask 277504
        %v496 = vsel %vm495, %v494, %v493
        %v499 = vadd.f32 %v408, %v496
        %v500 = vadd.f32 %v409, %v494
        %503 = vrot.lane.b32.xlu0 %v499, 127
        %v504 = vpop.permute.xlu0 %503
        %505 = vrot.lane.b32.xlu0 %v500, 127
        %v506 = vpop.permute.xlu0 %505
        %v507 = vrot.slane %v504, 4
        %v508 = vrot.slane %v506, 4
        %v509 = vsel %vm376, %v507, %v508
        %v510 = vsel %vm457, %v504, %v509
        %v513 = vmax.f32 %v480, %v510
        %v514 = vmax.f32 %v481, %v506
        %517 = vrot.lane.b32.xlu0 %v513, 125
        %v518 = vpop.permute.xlu0 %517
        %519 = vrot.lane.b32.xlu0 %v514, 125
        %v520 = vpop.permute.xlu0 %519
        %v521 = vrot.slane %v518, 4
        %v522 = vrot.slane %v520, 4
        %v523 = vsel %vm376, %v521, %v522
        %vm524 = vcmask 1022976
        %v525 = vsel %vm524, %v518, %v523
        %v528 = vmax.f32 %v461, %v525
        %v529 = vmax.f32 %v462, %v520
        %530 = vrot.lane.b32.xlu0 %v398, 30
        %v531 = vpop.permute.xlu0 %530
        %v532 = vrot.slane %v531, 4
        %v533 = vsel %vm423, %v532, %v531
        %v536 = vmax.f32 %v528, %v533
        %v537 = vmax.f32 %v529, %v532
        %540 = vrot.lane.b32.xlu0 %v536, 2
        %v541 = vpop.permute.xlu0 %540
        %542 = vrot.lane.b32.xlu0 %v537, 2
        %v543 = vpop.permute.xlu0 %542
        %v544 = vrot.slane %v541, 4
        %vm545 = vcmask 15360
        %v546 = vsel %vm545, %v544, %v541
        %v547 = vsel %vm545, %v544, %v543
        %550 = vst.msk [vmem:[#allocation2] sm:$0xff] %vm363, %v546
        %551 = vst.msk [vmem:[#allocation2 + $0x8] sm:$0xf] %vm340, %v547
        %v552 = vld [vmem:[#allocation2] sm:$0xff]
        %v553 = vld [vmem:[#allocation2 + $0x8] sm:$0xf]
        %556 = vrot.lane.b32.xlu0 %v552, 112
        %v557 = vpop.permute.xlu0 %556
        %558 = vrot.lane.b32.xlu0 %v553, 112
        %v559 = vpop.permute.xlu0 %558
        %v560 = vrot.slane %v557, 4
        %v561 = vrot.slane %v559, 4
        %v562 = vsel %vm376, %v560, %v561
        %v563 = vsel %vm378, %v557, %v562
        %v565 = vmax.f32 %v552, %v563
        %v567 = vmax.f32 %v553, %v559
        %570 = vrot.lane.b32.xlu0 %v565, 80
        %v571 = vpop.permute.xlu0 %570
        %572 = vrot.lane.b32.xlu0 %v567, 80
        %v573 = vpop.permute.xlu0 %572
        %v574 = vrot.slane %v571, 4
        %v575 = vrot.slane %v573, 4
        %v576 = vsel %vm376, %v574, %v575
        %v577 = vsel %vm393, %v571, %v576
        %v579 = vmax.f32 %v565, %v577
        %580 = vrot.lane.b32.xlu0 %v536, 98
        %v581 = vpop.permute.xlu0 %580
        %582 = vrot.lane.b32.xlu0 %v537, 98
        %v583 = vpop.permute.xlu0 %582
        %v584 = vrot.slane %v581, 4
        %v585 = vrot.slane %v583, 4
        %v586 = vsel %vm376, %v584, %v585
        %vm587 = vcmask 801792
        %v588 = vsel %vm587, %v581, %v586
        %v590 = vmax.f32 %v579, %v588
        %592 = vrot.lane.b32.xlu0 %v590, 32
        %v593 = vpop.permute.xlu0 %592
        %v594 = vrot.slane %v593, 4
        %v595 = vsel %vm357, %v594, %v593
        %598 = vst.msk [vmem:[#allocation2] sm:$0xff] %vm363, %v595
        %599 = vst.msk [vmem:[#allocation2 + $0x8] sm:$0xf] %vm340, %v594
        %v600 = vld [vmem:[#allocation2] sm:$0xff]
        %v601 = vld [vmem:[#allocation2 + $0x8] sm:$0xf]
        %v602 = vadd.f32 %v600, %v424
        %v603 = vadd.f32 %v601, %v422
        %v604 = vadd.f32 %v600, %v443
        %v605 = vadd.f32 %v601, %v441
        %608 = vrot.lane.b32.xlu0 %v604, 127
        %v609 = vpop.permute.xlu0 %608
        %610 = vrot.lane.b32.xlu0 %v605, 127
        %v611 = vpop.permute.xlu0 %610
        %v612 = vrot.slane %v609, 4
        %v613 = vrot.slane %v611, 4
        %v614 = vsel %vm376, %v612, %v613
        %v615 = vsel %vm457, %v609, %v614
        %v618 = vmax.f32 %v602, %v615
        %v619 = vmax.f32 %v603, %v611
        %v620 = vadd.f32 %v600, %v477
        %v621 = vadd.f32 %v601, %v475
        %v622 = vadd.f32 %v600, %v496
        %v623 = vadd.f32 %v601, %v494
        %626 = vrot.lane.b32.xlu0 %v622, 127
        %v627 = vpop.permute.xlu0 %626
        %628 = vrot.lane.b32.xlu0 %v623, 127
        %v629 = vpop.permute.xlu0 %628
        %v630 = vrot.slane %v627, 4
        %v631 = vrot.slane %v629, 4
        %v632 = vsel %vm376, %v630, %v631
        %v633 = vsel %vm457, %v627, %v632
        %v636 = vmax.f32 %v620, %v633
        %v637 = vmax.f32 %v621, %v629
        %640 = vrot.lane.b32.xlu0 %v636, 125
        %v641 = vpop.permute.xlu0 %640
        %642 = vrot.lane.b32.xlu0 %v637, 125
        %v643 = vpop.permute.xlu0 %642
        %v644 = vrot.slane %v641, 4
        %v645 = vrot.slane %v643, 4
        %v646 = vsel %vm376, %v644, %v645
        %v647 = vsel %vm524, %v641, %v646
        %v650 = vmax.f32 %v618, %v647
        %v651 = vmax.f32 %v619, %v643
        %652 = vrot.lane.b32.xlu0 %v590, 30
        %v653 = vpop.permute.xlu0 %652
        %v654 = vrot.slane %v653, 4
        %v655 = vsel %vm423, %v654, %v653
        %v658 = vmax.f32 %v650, %v655
        %v659 = vmax.f32 %v651, %v654
        %662 = vrot.lane.b32.xlu0 %v658, 2
        %v663 = vpop.permute.xlu0 %662
        %664 = vrot.lane.b32.xlu0 %v659, 2
        %v665 = vpop.permute.xlu0 %664
        %v666 = vrot.slane %v663, 4
        %v667 = vsel %vm545, %v666, %v663
        %v668 = vsel %vm545, %v666, %v665
        %671 = vst.msk [vmem:[#allocation2] sm:$0xff] %vm363, %v667
        %672 = vst.msk [vmem:[#allocation2 + $0x8] sm:$0xf] %vm340, %v668
        %v673 = vld [vmem:[#allocation2] sm:$0xff]
        %v674 = vld [vmem:[#allocation2 + $0x8] sm:$0xf]
        %677 = vrot.lane.b32.xlu0 %v673, 112
        %v678 = vpop.permute.xlu0 %677
        %679 = vrot.lane.b32.xlu0 %v674, 112
        %v680 = vpop.permute.xlu0 %679
        %v681 = vrot.slane %v678, 4
        %v682 = vrot.slane %v680, 4
        %v683 = vsel %vm376, %v681, %v682
        %v684 = vsel %vm378, %v678, %v683
        %v686 = vmax.f32 %v673, %v684
        %v688 = vmax.f32 %v674, %v680
        %691 = vrot.lane.b32.xlu0 %v686, 80
        %v692 = vpop.permute.xlu0 %691
        %693 = vrot.lane.b32.xlu0 %v688, 80
        %v694 = vpop.permute.xlu0 %693
        %v695 = vrot.slane %v692, 4
        %v696 = vrot.slane %v694, 4
        %v697 = vsel %vm376, %v695, %v696
        %v698 = vsel %vm393, %v692, %v697
        %v700 = vmax.f32 %v686, %v698
        %701 = vrot.lane.b32.xlu0 %v658, 98
        %v702 = vpop.permute.xlu0 %701
        %703 = vrot.lane.b32.xlu0 %v659, 98
        %v704 = vpop.permute.xlu0 %703
        %v705 = vrot.slane %v702, 4
        %v706 = vrot.slane %v704, 4
        %v707 = vsel %vm376, %v705, %v706
        %v708 = vsel %vm587, %v702, %v707
        %v710 = vmax.f32 %v700, %v708
        %712 = vrot.lane.b32.xlu0 %v710, 32
        %v713 = vpop.permute.xlu0 %712
        %v714 = vrot.slane %v713, 4
        %v715 = vsel %vm357, %v714, %v713
        %718 = vst.msk [vmem:[#allocation2] sm:$0xff] %vm363, %v715
        %719 = vst.msk [vmem:[#allocation2 + $0x8] sm:$0xf] %vm340, %v714
        %v720 = vld [vmem:[#allocation2] sm:$0xff]
        %v721 = vld [vmem:[#allocation2 + $0x8] sm:$0xf]
        %v722 = vadd.f32 %v720, %v424
        %v723 = vadd.f32 %v721, %v422
        %v724 = vadd.f32 %v720, %v443
        %v725 = vadd.f32 %v721, %v441
        %728 = vrot.lane.b32.xlu0 %v724, 127
        %v729 = vpop.permute.xlu0 %728
        %730 = vrot.lane.b32.xlu0 %v725, 127
        %v731 = vpop.permute.xlu0 %730
        %v732 = vrot.slane %v729, 4
        %v733 = vrot.slane %v731, 4
        %v734 = vsel %vm376, %v732, %v733
        %v735 = vsel %vm457, %v729, %v734
        %v738 = vmax.f32 %v722, %v735
        %v739 = vmax.f32 %v723, %v731
        %v740 = vadd.f32 %v720, %v477
        %v741 = vadd.f32 %v721, %v475
        %v742 = vadd.f32 %v720, %v496
        %v743 = vadd.f32 %v721, %v494
        %746 = vrot.lane.b32.xlu0 %v742, 127
        %v747 = vpop.permute.xlu0 %746
        %748 = vrot.lane.b32.xlu0 %v743, 127
        %v749 = vpop.permute.xlu0 %748
        %v750 = vrot.slane %v747, 4
        %v751 = vrot.slane %v749, 4
        %v752 = vsel %vm376, %v750, %v751
        %v753 = vsel %vm457, %v747, %v752
        %v756 = vmax.f32 %v740, %v753
        %v757 = vmax.f32 %v741, %v749
        %760 = vrot.lane.b32.xlu0 %v756, 125
        %v761 = vpop.permute.xlu0 %760
        %762 = vrot.lane.b32.xlu0 %v757, 125
        %v763 = vpop.permute.xlu0 %762
        %v764 = vrot.slane %v761, 4
        %v765 = vrot.slane %v763, 4
        %v766 = vsel %vm376, %v764, %v765
        %v767 = vsel %vm524, %v761, %v766
        %v770 = vmax.f32 %v738, %v767
        %v771 = vmax.f32 %v739, %v763
        %772 = vrot.lane.b32.xlu0 %v710, 30
        %v773 = vpop.permute.xlu0 %772
        %v774 = vrot.slane %v773, 4
        %v775 = vsel %vm423, %v774, %v773
        %v778 = vmax.f32 %v770, %v775
        %v779 = vmax.f32 %v771, %v774
        %v780 = vld [vmem:[%s3] sm:$0xff]
        %s781 = scalar_lea.vmem %s3, 8
        %v782 = vld [vmem:[%s781] sm:$0xff]
        %v783 = vcombine.high %v536, %v536
        %784 = vrot.lane.b32.xlu0 %v783, 98
        %v785 = vpop.permute.xlu0 %784
        %v786 = vsel %vm587, %v581, %v785
        %v787 = vsel %vm587, %v785, %v583
        %vm788 = vcmask 31744
        %v790 = vsel %vm788, %v782, 0
        %v792 = vsel %vm376, %v786, 0
        %v794 = vsel %vm376, %v787, 0
        %796 = vmatprep.subr.mxu0 %v794
        %797 = vmatpush1.msra.mxu0 %v792
        %798 = vmatprep.subr.mxu0 0.0
        %799 = vmatpush1.msra.mxu0 0.0
        %800 = vmatprep.subr.mxu0 0.0
        %801 = vmatpush1.msra.mxu0 0.0
        %802 = vmatprep.subr.mxu0 0.0
        %803 = vmatpush1.msra.mxu0 0.0
        %804 = vmatprep.subr.mxu0 0.0
        %805 = vmatpush1.msra.mxu0 0.0
        %806 = vmatprep.subr.mxu0 0.0
        %807 = vmatpush1.msra.mxu0 0.0
        %808 = vmatprep.subr.mxu0 0.0
        %809 = vmatpush1.msra.mxu0 0.0
        %810 = vmatprep.subr.mxu0 0.0
        %811 = vmatpush1.msra.mxu0 0.0
        %812 = vmatprep.subr.mxu0 0.0
        %813 = vmatpush1.msra.mxu0 0.0
        %814 = vmatprep.subr.mxu0 0.0
        %815 = vmatpush1.msra.mxu0 0.0
        %816 = vmatprep.subr.mxu0 0.0
        %817 = vmatpush1.msra.mxu0 0.0
        %818 = vmatprep.subr.mxu0 0.0
        %819 = vmatpush1.msra.mxu0 0.0
        %820 = vmatprep.subr.mxu0 0.0
        %821 = vmatpush1.msra.mxu0 0.0
        %822 = vmatprep.subr.mxu0 0.0
        %823 = vmatpush1.msra.mxu0 0.0
        %824 = vmatprep.subr.mxu0 0.0
        %825 = vmatpush1.msra.mxu0 0.0
        %826 = vmatprep.subr.mxu0 0.0
        %827 = vmatpush1.msra.mxu0 0.0
        %828 = vmatprep.subr.mxu0 0.0
        %829 = vmatpush1.msra.mxu0 0.0
        %830 = vmatprep.subr.mxu0 0.0
        %831 = vmatpush1.msra.mxu0 0.0
        %832 = vmatprep.subr.mxu0 0.0
        %833 = vmatpush1.msra.mxu0 0.0
        %834 = vmatprep.subr.mxu0 0.0
        %835 = vmatpush1.msra.mxu0 0.0
        %836 = vmatprep.subr.mxu0 0.0
        %837 = vmatpush1.msra.mxu0 0.0
        %838 = vmatprep.subr.mxu0 0.0
        %839 = vmatpush1.msra.mxu0 0.0
        %840 = vmatprep.subr.mxu0 0.0
        %841 = vmatpush1.msra.mxu0 0.0
        %842 = vmatprep.subr.mxu0 0.0
        %843 = vmatpush1.msra.mxu0 0.0
        %844 = vmatprep.subr.mxu0 0.0
        %845 = vmatpush1.msra.mxu0 0.0
        %846 = vmatprep.subr.mxu0 0.0
        %847 = vmatpush1.msra.mxu0 0.0
        %848 = vmatprep.subr.mxu0 0.0
        %849 = vmatpush1.msra.mxu0 0.0
        %850 = vmatprep.subr.mxu0 0.0
        %851 = vmatpush1.msra.mxu0 0.0
        %852 = vmatprep.subr.mxu0 0.0
        %853 = vmatpush1.msra.mxu0 0.0
        %854 = vmatprep.subr.mxu0 0.0
        %855 = vmatpush1.msra.mxu0 0.0
        %856 = vmatprep.subr.mxu0 0.0
        %857 = vmatpush1.msra.mxu0 0.0
        %858 = vmatprep.subr.mxu0 0.0
        %859 = vmatpush1.msra.mxu0 0.0
        %860 = vmatprep.mubr.f32.mxu0 0.0
        %861 = vmatmul.mubr.f32.gmra.mrb[0].mxu0 %v790
        %v862 = vpop.f32.mrb[0].mxu0
        %v863 = vadd.f32 0.0, %v862
        %v864 = vpop.f32.mrb[0].mxu0
        %v865 = vadd.f32 0.0, %v864
        %866 = vdwg.mxu0
        %v868 = vsel %vm788, %v780, 0
        %v870 = vsel %vm376, %v338, 0
        %v872 = vsel %vm376, %v339, 0
        %874 = vmatprep.subr.mxu0 %v872
        %875 = vmatpush1.msra.mxu0 %v870
        %876 = vmatprep.subr.mxu0 0.0
        %877 = vmatpush1.msra.mxu0 0.0
        %878 = vmatprep.subr.mxu0 0.0
        %879 = vmatpush1.msra.mxu0 0.0
        %880 = vmatprep.subr.mxu0 0.0
        %881 = vmatpush1.msra.mxu0 0.0
        %882 = vmatprep.subr.mxu0 0.0
        %883 = vmatpush1.msra.mxu0 0.0
        %884 = vmatprep.subr.mxu0 0.0
        %885 = vmatpush1.msra.mxu0 0.0
        %886 = vmatprep.subr.mxu0 0.0
        %887 = vmatpush1.msra.mxu0 0.0
        %888 = vmatprep.subr.mxu0 0.0
        %889 = vmatpush1.msra.mxu0 0.0
        %890 = vmatprep.subr.mxu0 0.0
        %891 = vmatpush1.msra.mxu0 0.0
        %892 = vmatprep.subr.mxu0 0.0
        %893 = vmatpush1.msra.mxu0 0.0
        %894 = vmatprep.subr.mxu0 0.0
        %895 = vmatpush1.msra.mxu0 0.0
        %896 = vmatprep.subr.mxu0 0.0
        %897 = vmatpush1.msra.mxu0 0.0
        %898 = vmatprep.subr.mxu0 0.0
        %899 = vmatpush1.msra.mxu0 0.0
        %900 = vmatprep.subr.mxu0 0.0
        %901 = vmatpush1.msra.mxu0 0.0
        %902 = vmatprep.subr.mxu0 0.0
        %903 = vmatpush1.msra.mxu0 0.0
        %904 = vmatprep.subr.mxu0 0.0
        %905 = vmatpush1.msra.mxu0 0.0
        %906 = vmatprep.subr.mxu0 0.0
        %907 = vmatpush1.msra.mxu0 0.0
        %908 = vmatprep.subr.mxu0 0.0
        %909 = vmatpush1.msra.mxu0 0.0
        %910 = vmatprep.subr.mxu0 0.0
        %911 = vmatpush1.msra.mxu0 0.0
        %912 = vmatprep.subr.mxu0 0.0
        %913 = vmatpush1.msra.mxu0 0.0
        %914 = vmatprep.subr.mxu0 0.0
        %915 = vmatpush1.msra.mxu0 0.0
        %916 = vmatprep.subr.mxu0 0.0
        %917 = vmatpush1.msra.mxu0 0.0
        %918 = vmatprep.subr.mxu0 0.0
        %919 = vmatpush1.msra.mxu0 0.0
        %920 = vmatprep.subr.mxu0 0.0
        %921 = vmatpush1.msra.mxu0 0.0
        %922 = vmatprep.subr.mxu0 0.0
        %923 = vmatpush1.msra.mxu0 0.0
        %924 = vmatprep.subr.mxu0 0.0
        %925 = vmatpush1.msra.mxu0 0.0
        %926 = vmatprep.subr.mxu0 0.0
        %927 = vmatpush1.msra.mxu0 0.0
        %928 = vmatprep.subr.mxu0 0.0
        %929 = vmatpush1.msra.mxu0 0.0
        %930 = vmatprep.subr.mxu0 0.0
        %931 = vmatpush1.msra.mxu0 0.0
        %932 = vmatprep.subr.mxu0 0.0
        %933 = vmatpush1.msra.mxu0 0.0
        %934 = vmatprep.subr.mxu0 0.0
        %935 = vmatpush1.msra.mxu0 0.0
        %936 = vmatprep.subr.mxu0 0.0
        %937 = vmatpush1.msra.mxu0 0.0
        %938 = vmatprep.mubr.f32.mxu0 0.0
        %939 = vmatmul.mubr.f32.gmra.mrb[0].mxu0 %v868
        %v940 = vpop.f32.mrb[0].mxu0
        %v941 = vadd.f32 %v863, %v940
        %v942 = vpop.f32.mrb[0].mxu0
        %v943 = vadd.f32 %v865, %v942
        %944 = vdwg.mxu0
        %s945 = scalar_lea.vmem %s3, 16
        %v946 = vld [vmem:[%s945] sm:$0xff]
        %v947 = vcombine.high %v658, %v658
        %948 = vrot.lane.b32.xlu0 %v947, 98
        %v949 = vpop.permute.xlu0 %948
        %v950 = vsel %vm587, %v702, %v949
        %v951 = vsel %vm587, %v949, %v704
        %v953 = vsel %vm788, %v946, 0
        %v955 = vsel %vm376, %v950, 0
        %v957 = vsel %vm376, %v951, 0
        %959 = vmatprep.subr.mxu0 %v957
        %960 = vmatpush1.msra.mxu0 %v955
        %961 = vmatprep.subr.mxu0 0.0
        %962 = vmatpush1.msra.mxu0 0.0
        %963 = vmatprep.subr.mxu0 0.0
        %964 = vmatpush1.msra.mxu0 0.0
        %965 = vmatprep.subr.mxu0 0.0
        %966 = vmatpush1.msra.mxu0 0.0
        %967 = vmatprep.subr.mxu0 0.0
        %968 = vmatpush1.msra.mxu0 0.0
        %969 = vmatprep.subr.mxu0 0.0
        %970 = vmatpush1.msra.mxu0 0.0
        %971 = vmatprep.subr.mxu0 0.0
        %972 = vmatpush1.msra.mxu0 0.0
        %973 = vmatprep.subr.mxu0 0.0
        %974 = vmatpush1.msra.mxu0 0.0
        %975 = vmatprep.subr.mxu0 0.0
        %976 = vmatpush1.msra.mxu0 0.0
        %977 = vmatprep.subr.mxu0 0.0
        %978 = vmatpush1.msra.mxu0 0.0
        %979 = vmatprep.subr.mxu0 0.0
        %980 = vmatpush1.msra.mxu0 0.0
        %981 = vmatprep.subr.mxu0 0.0
        %982 = vmatpush1.msra.mxu0 0.0
        %983 = vmatprep.subr.mxu0 0.0
        %984 = vmatpush1.msra.mxu0 0.0
        %985 = vmatprep.subr.mxu0 0.0
        %986 = vmatpush1.msra.mxu0 0.0
        %987 = vmatprep.subr.mxu0 0.0
        %988 = vmatpush1.msra.mxu0 0.0
        %989 = vmatprep.subr.mxu0 0.0
        %990 = vmatpush1.msra.mxu0 0.0
        %991 = vmatprep.subr.mxu0 0.0
        %992 = vmatpush1.msra.mxu0 0.0
        %993 = vmatprep.subr.mxu0 0.0
        %994 = vmatpush1.msra.mxu0 0.0
        %995 = vmatprep.subr.mxu0 0.0
        %996 = vmatpush1.msra.mxu0 0.0
        %997 = vmatprep.subr.mxu0 0.0
        %998 = vmatpush1.msra.mxu0 0.0
        %999 = vmatprep.subr.mxu0 0.0
        %1000 = vmatpush1.msra.mxu0 0.0
        %1001 = vmatprep.subr.mxu0 0.0
        %1002 = vmatpush1.msra.mxu0 0.0
        %1003 = vmatprep.subr.mxu0 0.0
        %1004 = vmatpush1.msra.mxu0 0.0
        %1005 = vmatprep.subr.mxu0 0.0
        %1006 = vmatpush1.msra.mxu0 0.0
        %1007 = vmatprep.subr.mxu0 0.0
        %1008 = vmatpush1.msra.mxu0 0.0
        %1009 = vmatprep.subr.mxu0 0.0
        %1010 = vmatpush1.msra.mxu0 0.0
        %1011 = vmatprep.subr.mxu0 0.0
        %1012 = vmatpush1.msra.mxu0 0.0
        %1013 = vmatprep.subr.mxu0 0.0
        %1014 = vmatpush1.msra.mxu0 0.0
        %1015 = vmatprep.subr.mxu0 0.0
        %1016 = vmatpush1.msra.mxu0 0.0
        %1017 = vmatprep.subr.mxu0 0.0
        %1018 = vmatpush1.msra.mxu0 0.0
        %1019 = vmatprep.subr.mxu0 0.0
        %1020 = vmatpush1.msra.mxu0 0.0
        %1021 = vmatprep.subr.mxu0 0.0
        %1022 = vmatpush1.msra.mxu0 0.0
        %1023 = vmatprep.mubr.f32.mxu0 0.0
        %1024 = vmatmul.mubr.f32.gmra.mrb[0].mxu0 %v953
        %v1025 = vpop.f32.mrb[0].mxu0
        %v1026 = vadd.f32 0.0, %v1025
        %v1027 = vpop.f32.mrb[0].mxu0
        %v1028 = vadd.f32 0.0, %v1027
        %1029 = vdwg.mxu0
        %v1030 = vadd.f32 %v941, %v1026
        %v1031 = vadd.f32 %v943, %v1028
        %s1032 = scalar_lea.vmem %s3, 24
        %v1033 = vld [vmem:[%s1032] sm:$0xff]
        %v1036 = vcombine.high %v778, %v778
        %1037 = vrot.lane.b32.xlu0 %v778, 98
        %v1038 = vpop.permute.xlu0 %1037
        %1039 = vrot.lane.b32.xlu0 %v1036, 98
        %v1040 = vpop.permute.xlu0 %1039
        %1041 = vrot.lane.b32.xlu0 %v779, 98
        %v1042 = vpop.permute.xlu0 %1041
        %v1043 = vsel %vm587, %v1038, %v1040
        %v1044 = vsel %vm587, %v1040, %v1042
        %v1046 = vsel %vm788, %v1033, 0
        %v1048 = vsel %vm376, %v1043, 0
        %v1050 = vsel %vm376, %v1044, 0
        %1052 = vmatprep.subr.mxu0 %v1050
        %1053 = vmatpush1.msra.mxu0 %v1048
        %1054 = vmatprep.subr.mxu0 0.0
        %1055 = vmatpush1.msra.mxu0 0.0
        %1056 = vmatprep.subr.mxu0 0.0
        %1057 = vmatpush1.msra.mxu0 0.0
        %1058 = vmatprep.subr.mxu0 0.0
        %1059 = vmatpush1.msra.mxu0 0.0
        %1060 = vmatprep.subr.mxu0 0.0
        %1061 = vmatpush1.msra.mxu0 0.0
        %1062 = vmatprep.subr.mxu0 0.0
        %1063 = vmatpush1.msra.mxu0 0.0
        %1064 = vmatprep.subr.mxu0 0.0
        %1065 = vmatpush1.msra.mxu0 0.0
        %1066 = vmatprep.subr.mxu0 0.0
        %1067 = vmatpush1.msra.mxu0 0.0
        %1068 = vmatprep.subr.mxu0 0.0
        %1069 = vmatpush1.msra.mxu0 0.0
        %1070 = vmatprep.subr.mxu0 0.0
        %1071 = vmatpush1.msra.mxu0 0.0
        %1072 = vmatprep.subr.mxu0 0.0
        %1073 = vmatpush1.msra.mxu0 0.0
        %1074 = vmatprep.subr.mxu0 0.0
        %1075 = vmatpush1.msra.mxu0 0.0
        %1076 = vmatprep.subr.mxu0 0.0
        %1077 = vmatpush1.msra.mxu0 0.0
        %1078 = vmatprep.subr.mxu0 0.0
        %1079 = vmatpush1.msra.mxu0 0.0
        %1080 = vmatprep.subr.mxu0 0.0
        %1081 = vmatpush1.msra.mxu0 0.0
        %1082 = vmatprep.subr.mxu0 0.0
        %1083 = vmatpush1.msra.mxu0 0.0
        %1084 = vmatprep.subr.mxu0 0.0
        %1085 = vmatpush1.msra.mxu0 0.0
        %1086 = vmatprep.subr.mxu0 0.0
        %1087 = vmatpush1.msra.mxu0 0.0
        %1088 = vmatprep.subr.mxu0 0.0
        %1089 = vmatpush1.msra.mxu0 0.0
        %1090 = vmatprep.subr.mxu0 0.0
        %1091 = vmatpush1.msra.mxu0 0.0
        %1092 = vmatprep.subr.mxu0 0.0
        %1093 = vmatpush1.msra.mxu0 0.0
        %1094 = vmatprep.subr.mxu0 0.0
        %1095 = vmatpush1.msra.mxu0 0.0
        %1096 = vmatprep.subr.mxu0 0.0
        %1097 = vmatpush1.msra.mxu0 0.0
        %1098 = vmatprep.subr.mxu0 0.0
        %1099 = vmatpush1.msra.mxu0 0.0
        %1100 = vmatprep.subr.mxu0 0.0
        %1101 = vmatpush1.msra.mxu0 0.0
        %1102 = vmatprep.subr.mxu0 0.0
        %1103 = vmatpush1.msra.mxu0 0.0
        %1104 = vmatprep.subr.mxu0 0.0
        %1105 = vmatpush1.msra.mxu0 0.0
        %1106 = vmatprep.subr.mxu0 0.0
        %1107 = vmatpush1.msra.mxu0 0.0
        %1108 = vmatprep.subr.mxu0 0.0
        %1109 = vmatpush1.msra.mxu0 0.0
        %1110 = vmatprep.subr.mxu0 0.0
        %1111 = vmatpush1.msra.mxu0 0.0
        %1112 = vmatprep.subr.mxu0 0.0
        %1113 = vmatpush1.msra.mxu0 0.0
        %1114 = vmatprep.subr.mxu0 0.0
        %1115 = vmatpush1.msra.mxu0 0.0
        %1116 = vmatprep.mubr.f32.mxu0 0.0
        %1117 = vmatmul.mubr.f32.gmra.mrb[0].mxu0 %v1046
        %v1118 = vpop.f32.mrb[0].mxu0
        %v1119 = vadd.f32 0.0, %v1118
        %v1120 = vpop.f32.mrb[0].mxu0
        %v1121 = vadd.f32 0.0, %v1120
        %1122 = vdwg.mxu0
        %v1123 = vadd.f32 %v1030, %v1119
        %v1124 = vadd.f32 %v1031, %v1121
        %v1125 = vld [vmem:[%s4] sm:$0xff]
        %1127 = vset.pattern.permute.xlu0 0
        %1128 = vperm.xlu0 %1127, %v1125
        %v1129 = vpop.permute.xlu0 %1128
        %v1131 = vadd.f32 %v1123, %v1129
        %v1132 = vadd.f32 %v1124, %v1129
        %vm1133 = vcmp.gt.f32.partialorder %v1131, 0.0
        %vm1134 = vcmp.gt.f32.partialorder %v1132, 0.0
        %v1135 = vmul.f32 %v1131, 0.1
        %v1136 = vmul.f32 %v1132, 0.1
        %v1137 = vsel %vm1133, %v1131, %v1135
        %v1138 = vsel %vm1134, %v1132, %v1136
        %1139 = vst [vmem:[%s244] sm:$0xff] %v1137
        %1140 = vst [vmem:[%s244 + $0x8] sm:$0xff] %v1138
        %s1141 = sand.u32 %s159, 1
        %s1142 = scalar_lea.sflag [#allocation4], %s1141
        %s1143 = sand.u32 %s159, 1
        %s1144 = smul.addr %s1143, 16
        %s1145 = scalar_lea.vmem [#allocation3], %s1144
        // Predicated region
        $region45: #{tpu_custom_call.1} parent=43 // pred_check
          %p1146 = pneg %p169
        $region46: #{tpu_custom_call.1} parent=43 // pred_check_branch
          %1148 = sbr.rel (%p1146) target = $region48
        $region47: #{tpu_custom_call.1} parent=43 // pred_region
          %s1150 = ssub.s32 256, 256
          %1151 = vsyncadd %s1142, %s1150
          %s1152 = smul.addr %s20, 2
          %s1153 = smul.addr %s1152, 128
          %s1154 = scalar_lea.hbm %s6, %s1153
          %s1156 = sshll.u32 %s1145, 4
          %s1157 = int_to_ptr.vmem [resolvable:$true] %s1156
          %1159 = dma.vmem_to_hbm [thread:$0]  %s1157, 256, %s1154, %s1142
        $region48: #{tpu_custom_call.1} parent=43 // pred_fallthru
          _
      $region44: #{tpu_custom_call.1} parent=5 // pred_fallthru
        _
      %p1160 = scmp.le.s32.totalorder 2, %s15
      // Predicated region
      $region49: #{tpu_custom_call.1} parent=5 // pred_check
        %p1161 = pneg %p1160
      $region50: #{tpu_custom_call.1} parent=5 // pred_check_branch
        %1163 = sbr.rel (%p1161) target = $region52
      $region51: #{tpu_custom_call.1} parent=5 // pred_region
        %s1164 = ssub.s32 %s15, 2
        // Predicated region
        $region53: #{tpu_custom_call.1} parent=51 // pred_check
          %p1165 = pneg %p175
        $region54: #{tpu_custom_call.1} parent=51 // pred_check_branch
          %1167 = sbr.rel (%p1165) target = $region56
        $region55: #{tpu_custom_call.1} parent=51 // pred_region
          %s1168 = sand.u32 %s160, 1
          %s1169 = scalar_lea.sflag [#allocation4], %s1168
          %s1170 = sand.u32 %s160, 1
          %s1171 = smul.addr %s1170, 16
          %s1172 = scalar_lea.vmem [#allocation3], %s1171
          %1173 = dma.done %s1169, 256
        $region56: #{tpu_custom_call.1} parent=51 // pred_fallthru
          _
      $region52: #{tpu_custom_call.1} parent=5 // pred_fallthru
        _
    $region6: #{tpu_custom_call.1} parent=1 // loop_footer
      %s19 = sadd.s32 1, %s15
    $region7: #{tpu_custom_call.1} parent=1 // loop_footer_branch
      %14 = sbr.rel target = $region3
    $region8: #{tpu_custom_call.1} parent=1 // loop_exit
      _
    %1174 = vsyncpa [#allocation4], 1
    %s1175 = scalar_lea.sflag [#allocation4], 1
    %1176 = vsyncpa %s1175, 1

</llo_original>
